<compile_context>
chip_gen: v5e
topology: v5e:2x2
jax: 0.10.0
libtpu: 0.0.40
codegen_flags: <defaults>
</compile_context>

<pallas_src>
import functools

import jax
import jax.numpy as jnp
from jax import lax
from jax.experimental import pallas as pl
from jax.experimental.pallas import tpu as pltpu

LANE = 128              # vreg lane width (last dim)
F32_SUBLANE = 8         # f32 sublane width (second-to-last dim)
DEFAULT_ROW_TILE = 512  # measured sweet spot (~85% of HBM roofline for mem-bound tiles)


def _round_up(n, m):
    return ((n + m - 1) // m) * m


def linear_kernel(x_ref, w_ref, b_ref, o_ref):
    # x_ref: [TB, IN_P]   (IN_P = in_f rounded up to the sublane width only)
    # w_ref: [IN_P, OUT_P] (weight pre-transposed once in the wrapper)
    # b_ref: [1, OUT_P]    o_ref: [TB, OUT_P]
    acc = lax.dot_general(
        x_ref[...], w_ref[...],
        dimension_numbers=(((1,), (0,)), ((), ())),   # standard [M,K] x [K,N]
        preferred_element_type=jnp.float32,
    )
    o_ref[...] = (acc + b_ref[...]).astype(o_ref.dtype)


@functools.partial(jax.jit, static_argnames=("row_tile", "compute_dtype"))
def basic_net_forward(x, weight, bias, *, row_tile=None, compute_dtype=None):
    """y = x @ weight.T + bias  (PyTorch nn.Linear semantics)."""
    batch, in_f = x.shape
    out_f = weight.shape[0]
    out_dtype = x.dtype

    cdt = jnp.dtype(compute_dtype) if compute_dtype is not None else jnp.dtype(x.dtype)
    sub = 16 if cdt.itemsize == 2 else F32_SUBLANE   # bf16 packs 16 rows per vreg

    # K padded only to the sublane width (4 -> 8), NOT to 128 lanes: x's HBM
    # read is ~2x the useful bytes instead of the previous 32x.  The weight's
    # output dim IS padded to 128 so the result tile / store stays lane-dense.
    in_p = _round_up(in_f, sub)
    out_p = _round_up(out_f, LANE)

    if row_tile is None:
        bp = _round_up(batch, sub)
        row_tile = min(DEFAULT_ROW_TILE, bp)
        # v7x has 2 TensorCores: keep >= 2 grid steps when the batch allows so
        # the "parallel" axis actually shards (measured neutral on v5e/v6e).
        if bp // row_tile < 2 and bp >= 2 * sub:
            row_tile = _round_up(bp // 2, sub)
    row_tile = _round_up(row_tile, sub)
    batch_p = _round_up(batch, row_tile)
    grid = (batch_p // row_tile,)

    # Wrapper-side ops (cheap: only row padding + sublane padding of a 4-wide
    # input; the weight transpose happens exactly once and the (8,128) weight
    # tile is VMEM-resident for the whole grid).
    x_p = jnp.zeros((batch_p, in_p), cdt).at[:batch, :in_f].set(x.astype(cdt))
    w_p = jnp.zeros((in_p, out_p), cdt).at[:in_f, :out_f].set(weight.T.astype(cdt))
    b_p = jnp.zeros((1, out_p), jnp.float32).at[0, :out_f].set(bias.astype(jnp.float32))

    # Advisory cost: the true (unpadded) arithmetic / traffic of the op.
    itemsize = jnp.dtype(x.dtype).itemsize
    cost = pl.CostEstimate(
        flops=2 * batch * in_f * out_f,
        transcendentals=0,
        bytes_accessed=itemsize * (batch * in_f + in_f * out_f + out_f + batch * out_f),
    )

    # Raise scoped VMEM only if double-buffered x/out blocks + resident w/b
    # approach v5e's 16 MiB default (never triggers at the default row_tile).
    vmem_need = (2 * row_tile * (in_p * cdt.itemsize + out_p * itemsize)
                 + in_p * out_p * cdt.itemsize + out_p * 4)
    vmem_limit = None
    if vmem_need > (12 << 20):
        vmem_limit = min(vmem_need + (4 << 20), 64 << 20)

    y_p = pl.pallas_call(
        linear_kernel,
        out_shape=jax.ShapeDtypeStruct((batch_p, out_p), out_dtype),
        grid=grid,
        in_specs=[
            pl.BlockSpec((row_tile, in_p), lambda i: (i, 0),
                         memory_space=pltpu.MemorySpace.VMEM),
            pl.BlockSpec((in_p, out_p), lambda i: (0, 0),
                         memory_space=pltpu.MemorySpace.VMEM),
            pl.BlockSpec((1, out_p), lambda i: (0, 0),
                         memory_space=pltpu.MemorySpace.VMEM),
        ],
        out_specs=pl.BlockSpec((row_tile, out_p), lambda i: (i, 0),
                               memory_space=pltpu.MemorySpace.VMEM),
        compiler_params=pltpu.CompilerParams(
            dimension_semantics=("parallel",),
            vmem_limit_bytes=vmem_limit,
        ),
        cost_estimate=cost,
    )(x_p, w_p, b_p)

    # Lane-dense writeback, sliced back to the true [batch, out_f].
    return y_p[:batch, :out_f]


def init_params(key, in_features=4, out_features=3):
    # Deterministic init mimicking PyTorch's default (uniform +-1/sqrt(fan_in)).
    kw, kb = jax.random.split(key)
    bound = 1.0 / jnp.sqrt(float(in_features))
    weight = jax.random.uniform(kw, (out_features, in_features), jnp.float32,
                                minval=-bound, maxval=bound)
    bias = jax.random.uniform(kb, (out_features,), jnp.float32,
                              minval=-bound, maxval=bound)
    return weight, bias


if __name__ == "__main__":
    key = jax.random.PRNGKey(0)
    k_x, k_x2, k_p = jax.random.split(key, 3)

    in_features, out_features = 4, 3
    weight, bias = init_params(k_p, in_features, out_features)

    # Small toy batch (matches the lesson's usage of BasicNet).
    x = jax.random.normal(k_x, (8, in_features), jnp.float32)
    y = jax.block_until_ready(basic_net_forward(x, weight, bias))
    y_ref = x @ weight.T + bias
    assert y.shape == (8, out_features)
    assert jnp.allclose(y, y_ref, atol=1e-5, rtol=1e-5)

    # Larger batch: exercises the big-tile, multi-step "parallel" grid path.
    x2 = jax.random.normal(k_x2, (1024, in_features), jnp.float32)
    y2 = jax.block_until_ready(basic_net_forward(x2, weight, bias))
    y2_ref = x2 @ weight.T + bias
    assert y2.shape == (1024, out_features)
    assert jnp.allclose(y2, y2_ref, atol=1e-5, rtol=1e-5)

    print("KERNEL_OK")
</pallas_src>

<mosaic_0001>
module attributes {stable_mosaic.version = 11 : i64} {
  func.func @linear_kernel(%arg0: i32, %arg1: memref<8x8xf32, #tpu.memory_space<vmem>>, %arg2: memref<8x128xf32, #tpu.memory_space<vmem>>, %arg3: memref<1x128xf32, #tpu.memory_space<vmem>>, %arg4: memref<8x128xf32, #tpu.memory_space<vmem>>) attributes {dimension_semantics = [#tpu.dimension_semantics<parallel>], iteration_bounds = array<i64: 1>, scalar_prefetch = 0 : i64, scratch_operands = 0 : i64, tpu.core_type = #tpu.core_type<tc>, window_params = [{transform_indices = @transform_0, window_bounds = array<i64: 8, 8>}, {pipeline_mode = #tpu.pipeline_mode<synchronous>, transform_indices = @transform_1, window_bounds = array<i64: 8, 128>}, {pipeline_mode = #tpu.pipeline_mode<synchronous>, transform_indices = @transform_2, window_bounds = array<i64: 1, 128>}, {transform_indices = @transform_3, window_bounds = array<i64: 8, 128>}]} {
    %c0 = arith.constant 0 : index
    %c0_0 = arith.constant 0 : index
    %0 = vector.load %arg1[%c0, %c0_0] : memref<8x8xf32, #tpu.memory_space<vmem>>, vector<8x8xf32>
    %c0_1 = arith.constant 0 : index
    %c0_2 = arith.constant 0 : index
    %1 = vector.load %arg2[%c0_1, %c0_2] : memref<8x128xf32, #tpu.memory_space<vmem>>, vector<8x128xf32>
    %cst = arith.constant dense<0.000000e+00> : vector<8x128xf32>
    %2 = tpu.matmul %0, %1, %cst {dimension_numbers = #tpu.dot_dimension_numbers<[1], [0], [0], [1], [0, 0, 1, 1], [], []>} : vector<8x8xf32>, vector<8x128xf32>, vector<8x128xf32> -> vector<8x128xf32>
    %c0_3 = arith.constant 0 : index
    %c0_4 = arith.constant 0 : index
    %3 = vector.load %arg3[%c0_3, %c0_4] : memref<1x128xf32, #tpu.memory_space<vmem>>, vector<1x128xf32>
    %4 = vector.broadcast %3 : vector<1x128xf32> to vector<8x128xf32>
    %5 = arith.addf %2, %4 : vector<8x128xf32>
    %c0_5 = arith.constant 0 : index
    %c0_6 = arith.constant 0 : index
    %6 = vector.load %arg4[%c0_5, %c0_6] : memref<8x128xf32, #tpu.memory_space<vmem>>, vector<8x128xf32>
    tpu.vector_store %arg4[%c0_5, %c0_6], %5 {strides = array<i32>} : memref<8x128xf32, #tpu.memory_space<vmem>>, vector<8x128xf32>,
    return
  }
  func.func @transform_0(%arg0: i32) -> (i32, i32) {
    %c0_i32 = arith.constant 0 : i32
    %c0_i32_0 = arith.constant 0 : i32
    return %arg0, %c0_i32 : i32, i32
  }
  func.func @transform_1(%arg0: i32) -> (i32, i32) {
    %c0_i32 = arith.constant 0 : i32
    %c0_i32_0 = arith.constant 0 : i32
    %c0_i32_1 = arith.constant 0 : i32
    return %c0_i32, %c0_i32_0 : i32, i32
  }
  func.func @transform_2(%arg0: i32) -> (i32, i32) {
    %c0_i32 = arith.constant 0 : i32
    %c0_i32_0 = arith.constant 0 : i32
    %c0_i32_1 = arith.constant 0 : i32
    return %c0_i32, %c0_i32_0 : i32, i32
  }
  func.func @transform_3(%arg0: i32) -> (i32, i32) {
    %c0_i32 = arith.constant 0 : i32
    %c0_i32_0 = arith.constant 0 : i32
    return %arg0, %c0_i32 : i32, i32
  }
}

</mosaic_0001>

<llo_original>
// kernel: basic_net_forward.1
$region0: #{basic_net_forward.1}
  #allocation0 [shape = 'u32[]', space=smem, size = 0x4, offset = 0x4, fixed_abs, tag = 'smem constant byte address 0x4 - core index']
  #allocation1 [shape = 'u32[72,128]{1,0:T(1,128)}', space=vmem, size = 0x9000, scoped, tag = 'internal scratch']
  %s0 = inlined_call_operand.vmem [shape: f32[8,8], index: 0, kind: input, shape index: {}]
  %s1 = inlined_call_operand.vmem [shape: f32[8,128], index: 1, kind: input, shape index: {}]
  %s2 = inlined_call_operand.vmem [shape: f32[1,128], index: 2, kind: input, shape index: {}]
  %s3 = inlined_call_operand.vmem [shape: f32[8,128], index: 3, kind: output, shape index: {}]
  %s4 = sld [smem:[#allocation0]]
  $region22: #{basic_net_forward.1} parent=0
    _
  %s6 = ssub.s32 1, %s4
  %s7 = scalar_select 0, %s6, %s4
  // Predicated region
  $region2: #{basic_net_forward.1} parent=0 // pred_check
    _
  $region3: #{basic_net_forward.1} parent=0 // pred_check_branch
    %9 = sbr.rel (0) target = $region5
  $region4: #{basic_net_forward.1} parent=0 // pred_region
    _
  $region5: #{basic_net_forward.1} parent=0 // pred_fallthru
    _
  // Predicated region
  $region6: #{basic_net_forward.1} parent=0 // pred_check
    _
  $region7: #{basic_net_forward.1} parent=0 // pred_check_branch
    %11 = sbr.rel (0) target = $region9
  $region8: #{basic_net_forward.1} parent=0 // pred_region
    _
  $region9: #{basic_net_forward.1} parent=0 // pred_fallthru
    _
  // Predicated region
  $region10: #{basic_net_forward.1} parent=0 // pred_check
    _
  $region11: #{basic_net_forward.1} parent=0 // pred_check_branch
    %13 = sbr.rel (0) target = $region13
  $region12: #{basic_net_forward.1} parent=0 // pred_region
    _
  $region13: #{basic_net_forward.1} parent=0 // pred_fallthru
    _
  %v14 = vld [vmem:[%s0] sm:$0xff]
  %v15 = vld [vmem:[%s1] sm:$0xff]
  %v16 = vld [vmem:[%s2] sm:$0x1]
  %v18 = vperm.slane %v16, 0
  %vm20 = vcmask 64512
  %v22 = vsel %vm20, %v14, 0
  %24 = vmatpush.msra.mxu0 0.0
  %25 = vmatpush.msra.mxu0 0.0
  %26 = vmatpush.msra.mxu0 0.0
  %27 = vmatpush.msra.mxu0 0.0
  %28 = vmatpush.msra.mxu0 0.0
  %29 = vmatpush.msra.mxu0 0.0
  %30 = vmatpush.msra.mxu0 0.0
  %31 = vmatpush.msra.mxu0 0.0
  %32 = vmatpush.msra.mxu0 0.0
  %33 = vmatpush.msra.mxu0 0.0
  %34 = vmatpush.msra.mxu0 0.0
  %35 = vmatpush.msra.mxu0 0.0
  %36 = vmatpush.msra.mxu0 0.0
  %37 = vmatpush.msra.mxu0 0.0
  %38 = vmatpush.msra.mxu0 0.0
  %39 = vmatpush.msra.mxu0 %v15
  %40 = vmatmul.f32.gmra.mxu0 %v22
  %v41 = vpop.f32.mrf.mxu0
  %v42 = vadd.f32 %v18, %v41
  %43 = vdwg.mxu0
  %44 = vst [vmem:[%s3] sm:$0xff] %v42
  // Predicated region
  $region14: #{basic_net_forward.1} parent=0 // pred_check
    _
  $region15: #{basic_net_forward.1} parent=0 // pred_check_branch
    %46 = sbr.rel (0) target = $region17
  $region16: #{basic_net_forward.1} parent=0 // pred_region
    _
  $region17: #{basic_net_forward.1} parent=0 // pred_fallthru
    _
  // Predicated region
  $region18: #{basic_net_forward.1} parent=0 // pred_check
    _
  $region19: #{basic_net_forward.1} parent=0 // pred_check_branch
    %48 = sbr.rel (0) target = $region21
  $region20: #{basic_net_forward.1} parent=0 // pred_region
    _
  $region21: #{basic_net_forward.1} parent=0 // pred_fallthru
    _

</llo_original>
